<compile_context>
chip_gen: v7x
topology: tpu7x:2x2x1
jax: 0.10.0
libtpu: 0.0.40
codegen_flags: <defaults>
</compile_context>

<pallas_src>
import functools

import jax
import jax.numpy as jnp
import numpy as np
from jax.experimental import pallas as pl
from jax.experimental.pallas import tpu as pltpu


def _round_up(x, m):
    return ((x + m - 1) // m) * m


# ------------------------------ Pallas kernel --------------------------------
def _critic_kernel(z_ref, mt_ref, act_ref,
                   w_z_ref, w_mt_ref, w_act_ref, b_in_ref,
                   w_h1_ref, w_h2_ref, b_h2_ref, w_out_ref, b_out_ref,
                   q_ref, *, dcp, edmp):
    bf16 = jnp.bfloat16
    z = z_ref[...].astype(bf16)
    mt = mt_ref[...].astype(bf16)
    act = act_ref[...].astype(bf16)

    # Fused lane-dense input projection, split row-wise over the three inputs
    # (replaces the host-side concat).  Column layout (all 128-aligned):
    #   [0:dcp)                 context pre-activation (padded)
    #   [dcp:dcp+edmp)          expanded attention logits (padded lanes -1e30)
    #   [dcp+edmp:dcp+2*edmp)   expert pre-activations (all experts, padded)
    #   [dcp+2*edmp:)           action contribution to Q layer 1 (+ its bias)
    p = (jnp.dot(z, w_z_ref[...], preferred_element_type=jnp.float32)
         + jnp.dot(mt, w_mt_ref[...], preferred_element_type=jnp.float32)
         + jnp.dot(act, w_act_ref[...], preferred_element_type=jnp.float32)
         + b_in_ref[...])                                      # (TB, Ntot) f32

    ctx = jnp.maximum(p[:, :dcp], 0.0)                         # (TB, dcp)
    le = p[:, dcp:dcp + edmp]                                  # (TB, edmp)
    hexp = jnp.maximum(p[:, dcp + edmp:dcp + 2 * edmp], 0.0)   # (TB, edmp)
    act_c = p[:, dcp + 2 * edmp:]                              # (TB, 2Hp) incl. b1

    # Expanded softmax over experts (each expert's logit repeated Dm times);
    # the missing factor Dm is folded into the mixture rows of w_h1 host-side.
    m = jnp.max(le, axis=-1, keepdims=True)
    pe = jnp.exp(le - m)
    inv = pl.reciprocal(jnp.sum(pe, axis=-1, keepdims=True), approx=True)
    weighted = (pe * inv) * hexp                               # (TB, edmp)

    # K = dcp + edmp (= 256) fused h1 matmul: [ctx | weighted] @ [w_h1c; w_h1m]
    h1_in = jnp.concatenate([ctx, weighted], axis=-1).astype(bf16)
    h1 = jnp.maximum(
        jnp.dot(h1_in, w_h1_ref[...], preferred_element_type=jnp.float32)
        + act_c, 0.0)                                          # (TB, 2Hp)
    h2 = jnp.maximum(
        jnp.dot(h1.astype(bf16), w_h2_ref[...], preferred_element_type=jnp.float32)
        + b_h2_ref[...], 0.0)                                  # (TB, 2Hp)
    # Lane-dense output: Q1 in lane 0, Q2 in lane 1, remaining lanes zero.
    q_ref[...] = (jnp.dot(h2.astype(bf16), w_out_ref[...],
                          preferred_element_type=jnp.float32)
                  + b_out_ref[...])                            # (TB, 128)


# --------------------------- host-side param packing -------------------------
def pack_critic_params(params):
    """Fuse the natural per-module parameters into the packed kernel layout."""
    f32, bf16 = jnp.float32, jnp.bfloat16
    wc, bc = params["wc"].astype(f32), params["bc"].astype(f32)      # (Dz,Dc),(1,Dc)
    we, be = params["we"].astype(f32), params["be"].astype(f32)      # (E,Dmt,Dm),(E,1,Dm)
    wa, ba = params["wa"].astype(f32), params["ba"].astype(f32)      # (Dz,E),(1,E)

    Dz, Dc = wc.shape
    E, Dmt, Dm = we.shape
    H = params["q1w2"].shape[0]
    Da = params["q1w1"].shape[0] - Dc - Dm
    EDm = E * Dm
    H2 = 2 * H
    # Pad every lane block to a multiple of 128 so all in-kernel slices are
    # lane-aligned (no tile-crossing copies, no masked lane work).
    Dcp = _round_up(Dc, 128)
    EDmp = _round_up(EDm, 128)
    H2p = _round_up(H2, 128)
    Ntot = Dcp + 2 * EDmp + H2p

    # Expanded attention weights: column e repeated Dm times.
    wa_exp = jnp.repeat(wa, Dm, axis=1)                               # (Dz, EDm)
    ba_exp = jnp.repeat(ba, Dm, axis=1)                               # (1, EDm)
    # Fused expert encoders: column block e holds expert e.
    we_all = jnp.transpose(we, (1, 0, 2)).reshape(Dmt, EDm)           # (Dmt, EDm)
    be_all = be.reshape(1, EDm)                                       # (1, EDm)

    # Stacked twin-Q first layer (N = 2H), split by concat order [ctx|mix|act].
    w1 = jnp.concatenate([params["q1w1"], params["q2w1"]], axis=1).astype(f32)
    b1 = jnp.concatenate([params["q1b1"], params["q2b1"]], axis=1).astype(f32)
    w1c, w1m, w1a = w1[:Dc], w1[Dc:Dc + Dm], w1[Dc + Dm:]

    # Row-split fused input projection (one block of rows per kernel input).
    w_z = jnp.zeros((Dz, Ntot), f32)
    w_z = w_z.at[:, 0:Dc].set(wc)
    w_z = w_z.at[:, Dcp:Dcp + EDm].set(wa_exp)

    w_mt = jnp.zeros((Dmt, Ntot), f32)
    w_mt = w_mt.at[:, Dcp + EDmp:Dcp + EDmp + EDm].set(we_all)

    w_act = jnp.zeros((Da, Ntot), f32)
    w_act = w_act.at[:, Dcp + 2 * EDmp:Dcp + 2 * EDmp + H2].set(w1a)

    b_in = jnp.zeros((1, Ntot), f32)
    b_in = b_in.at[:, 0:Dc].set(bc)
    b_in = b_in.at[:, Dcp:Dcp + EDm].set(ba_exp)
    # Padded logit lanes get a huge negative bias -> exactly zero softmax mass.
    b_in = b_in.at[:, Dcp + EDm:Dcp + EDmp].set(-1e30)
    b_in = b_in.at[:, Dcp + EDmp:Dcp + EDmp + EDm].set(be_all)
    b_in = b_in.at[:, Dcp + 2 * EDmp:Dcp + 2 * EDmp + H2].set(b1)   # fold Q bias 1

    # Stacked h1 weight: [ctx rows ; mixture rows]; mixture rows carry the
    # factor Dm that compensates the expanded softmax normalisation.
    w_h1 = jnp.zeros((Dcp + EDmp, H2p), f32)
    w_h1 = w_h1.at[0:Dc, 0:H2].set(w1c)
    w_h1 = w_h1.at[Dcp:Dcp + EDm, 0:H2].set(float(Dm) * jnp.tile(w1m, (E, 1)))

    # Block-diagonal fused layer 2 and lane-dense output layer.
    w_h2 = jnp.zeros((H2p, H2p), f32)
    w_h2 = w_h2.at[0:H, 0:H].set(params["q1w2"]).at[H:H2, H:H2].set(params["q2w2"])
    b_h2 = jnp.zeros((1, H2p), f32)
    b_h2 = b_h2.at[:, 0:H2].set(
        jnp.concatenate([params["q1b2"], params["q2b2"]], axis=1).astype(f32))

    w_out = jnp.zeros((H2p, 128), f32)
    w_out = w_out.at[0:H, 0:1].set(params["q1w3"]).at[H:H2, 1:2].set(params["q2w3"])
    b_out = jnp.zeros((1, 128), f32)
    b_out = b_out.at[:, 0:1].set(params["q1b3"]).at[:, 1:2].set(params["q2b3"])

    # Weights in bf16 (MXU operands, halved DMA/VMEM); biases stay f32 since
    # they are added after f32 accumulation.
    return dict(w_z=w_z.astype(bf16), w_mt=w_mt.astype(bf16),
                w_act=w_act.astype(bf16), b_in=b_in,
                w_h1=w_h1.astype(bf16), w_h2=w_h2.astype(bf16), b_h2=b_h2,
                w_out=w_out.astype(bf16), b_out=b_out)


# ------------------------------ wrapper ---------------------------------------
def critic_forward(mtobss, z_context, action, packed, *, block_b=1024):
    """Returns (Q1, Q2), each (batch, 1) float32."""
    B = mtobss.shape[0]
    Dz = z_context.shape[1]
    Dmt = mtobss.shape[1]
    Da = action.shape[1]

    # Recover the static block sizes from the packed shapes.
    dcp_edmp, h2p = packed["w_h1"].shape            # dcp + edmp, 2H padded
    ntot = packed["w_z"].shape[1]                   # dcp + 2*edmp + h2p
    edmp = ntot - h2p - dcp_edmp
    dcp = dcp_edmp - edmp

    # Batch tile: multiples of 8, at least 2 grid steps whenever possible so
    # the "parallel" axis shards across v7x's two TensorCores; the last block
    # may be partial (OOB rows are independent and discarded on writeback).
    if B <= 8:
        tb = 8
    elif B <= 2 * block_b:
        tb = min(block_b, _round_up(pl.cdiv(B, 2), 8))
    else:
        tb = block_b
    grid = (pl.cdiv(B, tb),)

    weights = (packed["w_z"], packed["w_mt"], packed["w_act"], packed["b_in"],
               packed["w_h1"], packed["w_h2"], packed["b_h2"],
               packed["w_out"], packed["b_out"])

    def full_spec(a):                               # VMEM-resident weights
        return pl.BlockSpec(a.shape, lambda i: (0, 0))

    flops_per_row = 2 * ((Dz + Dmt + Da) * ntot + dcp_edmp * h2p
                         + h2p * h2p + h2p * 128)
    weight_bytes = sum(int(w.size) * w.dtype.itemsize for w in weights)
    io_bytes = (B * (Dz * z_context.dtype.itemsize
                     + Dmt * mtobss.dtype.itemsize
                     + Da * action.dtype.itemsize)
                + B * 128 * 4)
    cost = pl.CostEstimate(flops=B * flops_per_row,
                           transcendentals=B * (edmp + 1),
                           bytes_accessed=io_bytes + weight_bytes)

    q = pl.pallas_call(
        functools.partial(_critic_kernel, dcp=dcp, edmp=edmp),
        out_shape=jax.ShapeDtypeStruct((B, 128), jnp.float32),
        grid=grid,
        in_specs=[pl.BlockSpec((tb, Dz), lambda i: (i, 0)),
                  pl.BlockSpec((tb, Dmt), lambda i: (i, 0)),
                  pl.BlockSpec((tb, Da), lambda i: (i, 0))]
                 + [full_spec(w) for w in weights],
        out_specs=pl.BlockSpec((tb, 128), lambda i: (i, 0)),
        compiler_params=pltpu.CompilerParams(
            dimension_semantics=("parallel",)),
        cost_estimate=cost,
    )(z_context, mtobss, action, *weights)

    # TODO(synk): detach_z_encs only stops gradients (no forward effect).
    return q[:, 0:1], q[:, 1:2]


# --------------------------- pure-JAX reference -------------------------------
def critic_reference(mtobss, z_context, action, params):
    ctx = jax.nn.relu(z_context @ params["wc"] + params["bc"])
    alpha = jax.nn.softmax(z_context @ params["wa"] + params["ba"], axis=-1)
    E = params["we"].shape[0]
    mix = 0.0
    for e in range(E):
        h_e = jax.nn.relu(mtobss @ params["we"][e] + params["be"][e])
        mix = mix + alpha[:, e:e + 1] * h_e
    x = jnp.concatenate([ctx, mix, action], axis=-1)

    def q(w1, b1, w2, b2, w3, b3):
        h = jax.nn.relu(x @ w1 + b1)
        h = jax.nn.relu(h @ w2 + b2)
        return h @ w3 + b3

    q1 = q(params["q1w1"], params["q1b1"], params["q1w2"], params["q1b2"],
           params["q1w3"], params["q1b3"])
    q2 = q(params["q2w1"], params["q2b1"], params["q2w2"], params["q2b2"],
           params["q2w3"], params["q2b3"])
    return q1, q2


# --------------------------------- main ---------------------------------------
if __name__ == "__main__":
    batch = 8
    state_dim = 12
    num_tasks = 4
    mtobs_dim = state_dim + num_tasks          # 16
    z_dim = 8
    d_ctx = 16                                 # output_dim_contextEnc
    d_mix = 32                                 # output_dim_mixtureEnc
    num_experts = 4
    action_dim = 4
    hidden = 64                                # critic_hidden_dim = [64, 64]
    q_in = d_ctx + d_mix + action_dim

    key = jax.random.PRNGKey(0)
    ks = iter(jax.random.split(key, 32))

    def p(shape, scale=0.1):
        return (scale * jax.random.normal(next(ks), shape)).astype(jnp.float32)

    params = {
        "wc": p((z_dim, d_ctx)), "bc": p((1, d_ctx)),
        "we": p((num_experts, mtobs_dim, d_mix)), "be": p((num_experts, 1, d_mix)),
        "wa": p((z_dim, num_experts)), "ba": p((1, num_experts)),
        "q1w1": p((q_in, hidden)), "q1b1": p((1, hidden)),
        "q1w2": p((hidden, hidden)), "q1b2": p((1, hidden)),
        "q1w3": p((hidden, 1)), "q1b3": p((1, 1)),
        "q2w1": p((q_in, hidden)), "q2b1": p((1, hidden)),
        "q2w2": p((hidden, hidden)), "q2b2": p((1, hidden)),
        "q2w3": p((hidden, 1)), "q2b3": p((1, 1)),
    }

    mtobss = p((batch, mtobs_dim), scale=1.0)
    z_context = p((batch, z_dim), scale=1.0)
    action = p((batch, action_dim), scale=1.0)

    packed = pack_critic_params(params)

    q1, q2 = jax.jit(critic_forward)(mtobss, z_context, action, packed)
    jax.block_until_ready((q1, q2))

    r1, r2 = critic_reference(mtobss, z_context, action, params)
    # bf16 MXU operands (f32 accumulation) -> loosened tolerance.
    np.testing.assert_allclose(np.asarray(q1), np.asarray(r1), rtol=2e-2, atol=2e-2)
    np.testing.assert_allclose(np.asarray(q2), np.asarray(r2), rtol=2e-2, atol=2e-2)
    assert q1.shape == (batch, 1) and q2.shape == (batch, 1)

    print("KERNEL_OK")
</pallas_src>

<mosaic_0001>
module attributes {stable_mosaic.version = 11 : i64} {
  func.func @_critic_kernel(%arg0: i32, %arg1: memref<8x8xf32, #tpu.memory_space<vmem>>, %arg2: memref<8x16xf32, #tpu.memory_space<vmem>>, %arg3: memref<8x4xf32, #tpu.memory_space<vmem>>, %arg4: memref<8x512xbf16, #tpu.memory_space<vmem>>, %arg5: memref<16x512xbf16, #tpu.memory_space<vmem>>, %arg6: memref<4x512xbf16, #tpu.memory_space<vmem>>, %arg7: memref<1x512xf32, #tpu.memory_space<vmem>>, %arg8: memref<256x128xbf16, #tpu.memory_space<vmem>>, %arg9: memref<128x128xbf16, #tpu.memory_space<vmem>>, %arg10: memref<1x128xf32, #tpu.memory_space<vmem>>, %arg11: memref<128x128xbf16, #tpu.memory_space<vmem>>, %arg12: memref<1x128xf32, #tpu.memory_space<vmem>>, %arg13: memref<8x128xf32, #tpu.memory_space<vmem>>) attributes {dimension_semantics = [#tpu.dimension_semantics<parallel>], iteration_bounds = array<i64: 1>, scalar_prefetch = 0 : i64, scratch_operands = 0 : i64, tpu.core_type = #tpu.core_type<tc>, window_params = [{transform_indices = @transform_0, window_bounds = array<i64: 8, 8>}, {transform_indices = @transform_1, window_bounds = array<i64: 8, 16>}, {transform_indices = @transform_2, window_bounds = array<i64: 8, 4>}, {pipeline_mode = #tpu.pipeline_mode<synchronous>, transform_indices = @transform_3, window_bounds = array<i64: 8, 512>}, {pipeline_mode = #tpu.pipeline_mode<synchronous>, transform_indices = @transform_4, window_bounds = array<i64: 16, 512>}, {pipeline_mode = #tpu.pipeline_mode<synchronous>, transform_indices = @transform_5, window_bounds = array<i64: 4, 512>}, {pipeline_mode = #tpu.pipeline_mode<synchronous>, transform_indices = @transform_6, window_bounds = array<i64: 1, 512>}, {pipeline_mode = #tpu.pipeline_mode<synchronous>, transform_indices = @transform_7, window_bounds = array<i64: 256, 128>}, {pipeline_mode = #tpu.pipeline_mode<synchronous>, transform_indices = @transform_8, window_bounds = array<i64: 128, 128>}, {pipeline_mode = #tpu.pipeline_mode<synchronous>, transform_indices = @transform_9, window_bounds = array<i64: 1, 128>}, {pipeline_mode = #tpu.pipeline_mode<synchronous>, transform_indices = @transform_10, window_bounds = array<i64: 128, 128>}, {pipeline_mode = #tpu.pipeline_mode<synchronous>, transform_indices = @transform_11, window_bounds = array<i64: 1, 128>}, {transform_indices = @transform_12, window_bounds = array<i64: 8, 128>}]} {
    %c0 = arith.constant 0 : index
    %c0_0 = arith.constant 0 : index
    %0 = vector.load %arg1[%c0, %c0_0] : memref<8x8xf32, #tpu.memory_space<vmem>>, vector<8x8xf32>
    %1 = arith.truncf %0 : vector<8x8xf32> to vector<8x8xbf16>
    %c0_1 = arith.constant 0 : index
    %c0_2 = arith.constant 0 : index
    %2 = vector.load %arg2[%c0_1, %c0_2] : memref<8x16xf32, #tpu.memory_space<vmem>>, vector<8x16xf32>
    %3 = arith.truncf %2 : vector<8x16xf32> to vector<8x16xbf16>
    %c0_3 = arith.constant 0 : index
    %c0_4 = arith.constant 0 : index
    %4 = vector.load %arg3[%c0_3, %c0_4] : memref<8x4xf32, #tpu.memory_space<vmem>>, vector<8x4xf32>
    %5 = arith.truncf %4 : vector<8x4xf32> to vector<8x4xbf16>
    %c0_5 = arith.constant 0 : index
    %c0_6 = arith.constant 0 : index
    %6 = vector.load %arg4[%c0_5, %c0_6] : memref<8x512xbf16, #tpu.memory_space<vmem>>, vector<8x512xbf16>
    %cst = arith.constant dense<0.000000e+00> : vector<8x512xf32>
    %7 = tpu.matmul %1, %6, %cst {dimension_numbers = #tpu.dot_dimension_numbers<[1], [0], [0], [1], [0, 0, 1, 1], [], []>} : vector<8x8xbf16>, vector<8x512xbf16>, vector<8x512xf32> -> vector<8x512xf32>
    %c0_7 = arith.constant 0 : index
    %c0_8 = arith.constant 0 : index
    %8 = vector.load %arg5[%c0_7, %c0_8] : memref<16x512xbf16, #tpu.memory_space<vmem>>, vector<16x512xbf16>
    %cst_9 = arith.constant dense<0.000000e+00> : vector<8x512xf32>
    %9 = tpu.matmul %3, %8, %cst_9 {dimension_numbers = #tpu.dot_dimension_numbers<[1], [0], [0], [1], [0, 0, 1, 1], [], []>} : vector<8x16xbf16>, vector<16x512xbf16>, vector<8x512xf32> -> vector<8x512xf32>
    %10 = arith.addf %7, %9 : vector<8x512xf32>
    %c0_10 = arith.constant 0 : index
    %c0_11 = arith.constant 0 : index
    %11 = vector.load %arg6[%c0_10, %c0_11] : memref<4x512xbf16, #tpu.memory_space<vmem>>, vector<4x512xbf16>
    %cst_12 = arith.constant dense<0.000000e+00> : vector<8x512xf32>
    %12 = tpu.matmul %5, %11, %cst_12 {dimension_numbers = #tpu.dot_dimension_numbers<[1], [0], [0], [1], [0, 0, 1, 1], [], []>} : vector<8x4xbf16>, vector<4x512xbf16>, vector<8x512xf32> -> vector<8x512xf32>
    %13 = arith.addf %10, %12 : vector<8x512xf32>
    %c0_13 = arith.constant 0 : index
    %c0_14 = arith.constant 0 : index
    %14 = vector.load %arg7[%c0_13, %c0_14] : memref<1x512xf32, #tpu.memory_space<vmem>>, vector<1x512xf32>
    %15 = vector.broadcast %14 : vector<1x512xf32> to vector<8x512xf32>
    %16 = arith.addf %13, %15 : vector<8x512xf32>
    %17 = vector.extract_strided_slice %16 {offsets = [0, 0], sizes = [8, 128], strides = [1, 1]} : vector<8x512xf32> to vector<8x128xf32>
    %cst_15 = arith.constant 0.000000e+00 : f32
    %18 = vector.broadcast %cst_15 : f32 to vector<8x128xf32>
    %19 = arith.maximumf %17, %18 : vector<8x128xf32>
    %20 = vector.extract_strided_slice %16 {offsets = [0, 128], sizes = [8, 128], strides = [1, 1]} : vector<8x512xf32> to vector<8x128xf32>
    %21 = vector.extract_strided_slice %16 {offsets = [0, 256], sizes = [8, 128], strides = [1, 1]} : vector<8x512xf32> to vector<8x128xf32>
    %cst_16 = arith.constant 0.000000e+00 : f32
    %22 = vector.broadcast %cst_16 : f32 to vector<8x128xf32>
    %23 = arith.maximumf %21, %22 : vector<8x128xf32>
    %24 = vector.extract_strided_slice %16 {offsets = [0, 384], sizes = [8, 128], strides = [1, 1]} : vector<8x512xf32> to vector<8x128xf32>
    %cst_17 = arith.constant dense<0xFF800000> : vector<8xf32>
    %25 = vector.multi_reduction <maximumf>, %20, %cst_17 [1] : vector<8x128xf32> to vector<8xf32>
    %26 = vector.shape_cast %25 : vector<8xf32> to vector<8x1xf32>
    %27 = vector.broadcast %26 : vector<8x1xf32> to vector<8x128xf32>
    %28 = arith.subf %20, %27 : vector<8x128xf32>
    %29 = math.exp %28 : vector<8x128xf32>
    %cst_18 = arith.constant dense<0.000000e+00> : vector<8xf32>
    %30 = vector.multi_reduction <add>, %29, %cst_18 [1] : vector<8x128xf32> to vector<8xf32>
    %31 = vector.shape_cast %30 : vector<8xf32> to vector<8x1xf32>
    %32 = tpu.reciprocal %31 {approx = true} : vector<8x1xf32> -> vector<8x1xf32>
    %33 = vector.broadcast %32 : vector<8x1xf32> to vector<8x128xf32>
    %34 = arith.mulf %29, %33 : vector<8x128xf32>
    %35 = arith.mulf %34, %23 : vector<8x128xf32>
    %36 = tpu.concatenate %19, %35 in 1 : vector<8x128xf32>, vector<8x128xf32> -> vector<8x256xf32>
    %37 = arith.truncf %36 : vector<8x256xf32> to vector<8x256xbf16>
    %c0_19 = arith.constant 0 : index
    %c0_20 = arith.constant 0 : index
    %38 = vector.load %arg8[%c0_19, %c0_20] : memref<256x128xbf16, #tpu.memory_space<vmem>>, vector<256x128xbf16>
    %cst_21 = arith.constant dense<0.000000e+00> : vector<8x128xf32>
    %39 = tpu.matmul %37, %38, %cst_21 {dimension_numbers = #tpu.dot_dimension_numbers<[1], [0], [0], [1], [0, 0, 1, 1], [], []>} : vector<8x256xbf16>, vector<256x128xbf16>, vector<8x128xf32> -> vector<8x128xf32>
    %40 = arith.addf %39, %24 : vector<8x128xf32>
    %cst_22 = arith.constant 0.000000e+00 : f32
    %41 = vector.broadcast %cst_22 : f32 to vector<8x128xf32>
    %42 = arith.maximumf %40, %41 : vector<8x128xf32>
    %43 = arith.truncf %42 : vector<8x128xf32> to vector<8x128xbf16>
    %c0_23 = arith.constant 0 : index
    %c0_24 = arith.constant 0 : index
    %44 = vector.load %arg9[%c0_23, %c0_24] : memref<128x128xbf16, #tpu.memory_space<vmem>>, vector<128x128xbf16>
    %cst_25 = arith.constant dense<0.000000e+00> : vector<8x128xf32>
    %45 = tpu.matmul %43, %44, %cst_25 {dimension_numbers = #tpu.dot_dimension_numbers<[1], [0], [0], [1], [0, 0, 1, 1], [], []>} : vector<8x128xbf16>, vector<128x128xbf16>, vector<8x128xf32> -> vector<8x128xf32>
    %c0_26 = arith.constant 0 : index
    %c0_27 = arith.constant 0 : index
    %46 = vector.load %arg10[%c0_26, %c0_27] : memref<1x128xf32, #tpu.memory_space<vmem>>, vector<1x128xf32>
    %47 = vector.broadcast %46 : vector<1x128xf32> to vector<8x128xf32>
    %48 = arith.addf %45, %47 : vector<8x128xf32>
    %cst_28 = arith.constant 0.000000e+00 : f32
    %49 = vector.broadcast %cst_28 : f32 to vector<8x128xf32>
    %50 = arith.maximumf %48, %49 : vector<8x128xf32>
    %51 = arith.truncf %50 : vector<8x128xf32> to vector<8x128xbf16>
    %c0_29 = arith.constant 0 : index
    %c0_30 = arith.constant 0 : index
    %52 = vector.load %arg11[%c0_29, %c0_30] : memref<128x128xbf16, #tpu.memory_space<vmem>>, vector<128x128xbf16>
    %cst_31 = arith.constant dense<0.000000e+00> : vector<8x128xf32>
    %53 = tpu.matmul %51, %52, %cst_31 {dimension_numbers = #tpu.dot_dimension_numbers<[1], [0], [0], [1], [0, 0, 1, 1], [], []>} : vector<8x128xbf16>, vector<128x128xbf16>, vector<8x128xf32> -> vector<8x128xf32>
    %c0_32 = arith.constant 0 : index
    %c0_33 = arith.constant 0 : index
    %54 = vector.load %arg12[%c0_32, %c0_33] : memref<1x128xf32, #tpu.memory_space<vmem>>, vector<1x128xf32>
    %55 = vector.broadcast %54 : vector<1x128xf32> to vector<8x128xf32>
    %56 = arith.addf %53, %55 : vector<8x128xf32>
    %c0_34 = arith.constant 0 : index
    %c0_35 = arith.constant 0 : index
    %57 = vector.load %arg13[%c0_34, %c0_35] : memref<8x128xf32, #tpu.memory_space<vmem>>, vector<8x128xf32>
    tpu.vector_store %arg13[%c0_34, %c0_35], %56 {strides = array<i32>} : memref<8x128xf32, #tpu.memory_space<vmem>>, vector<8x128xf32>,
    return
  }
  func.func @transform_0(%arg0: i32) -> (i32, i32) {
    %c0_i32 = arith.constant 0 : i32
    %c0_i32_0 = arith.constant 0 : i32
    return %arg0, %c0_i32 : i32, i32
  }
  func.func @transform_1(%arg0: i32) -> (i32, i32) {
    %c0_i32 = arith.constant 0 : i32
    %c0_i32_0 = arith.constant 0 : i32
    return %arg0, %c0_i32 : i32, i32
  }
  func.func @transform_2(%arg0: i32) -> (i32, i32) {
    %c0_i32 = arith.constant 0 : i32
    %c0_i32_0 = arith.constant 0 : i32
    return %arg0, %c0_i32 : i32, i32
  }
  func.func @transform_3(%arg0: i32) -> (i32, i32) {
    %c0_i32 = arith.constant 0 : i32
    %c0_i32_0 = arith.constant 0 : i32
    %c0_i32_1 = arith.constant 0 : i32
    return %c0_i32, %c0_i32_0 : i32, i32
  }
  func.func @transform_4(%arg0: i32) -> (i32, i32) {
    %c0_i32 = arith.constant 0 : i32
    %c0_i32_0 = arith.constant 0 : i32
    %c0_i32_1 = arith.constant 0 : i32
    return %c0_i32, %c0_i32_0 : i32, i32
  }
  func.func @transform_5(%arg0: i32) -> (i32, i32) {
    %c0_i32 = arith.constant 0 : i32
    %c0_i32_0 = arith.constant 0 : i32
    %c0_i32_1 = arith.constant 0 : i32
    return %c0_i32, %c0_i32_0 : i32, i32
  }
  func.func @transform_6(%arg0: i32) -> (i32, i32) {
    %c0_i32 = arith.constant 0 : i32
    %c0_i32_0 = arith.constant 0 : i32
    %c0_i32_1 = arith.constant 0 : i32
    return %c0_i32, %c0_i32_0 : i32, i32
  }
  func.func @transform_7(%arg0: i32) -> (i32, i32) {
    %c0_i32 = arith.constant 0 : i32
    %c0_i32_0 = arith.constant 0 : i32
    %c0_i32_1 = arith.constant 0 : i32
    return %c0_i32, %c0_i32_0 : i32, i32
  }
  func.func @transform_8(%arg0: i32) -> (i32, i32) {
    %c0_i32 = arith.constant 0 : i32
    %c0_i32_0 = arith.constant 0 : i32
    %c0_i32_1 = arith.constant 0 : i32
    return %c0_i32, %c0_i32_0 : i32, i32
  }
  func.func @transform_9(%arg0: i32) -> (i32, i32) {
    %c0_i32 = arith.constant 0 : i32
    %c0_i32_0 = arith.constant 0 : i32
    %c0_i32_1 = arith.constant 0 : i32
    return %c0_i32, %c0_i32_0 : i32, i32
  }
  func.func @transform_10(%arg0: i32) -> (i32, i32) {
    %c0_i32 = arith.constant 0 : i32
    %c0_i32_0 = arith.constant 0 : i32
    %c0_i32_1 = arith.constant 0 : i32
    return %c0_i32, %c0_i32_0 : i32, i32
  }
  func.func @transform_11(%arg0: i32) -> (i32, i32) {
    %c0_i32 = arith.constant 0 : i32
    %c0_i32_0 = arith.constant 0 : i32
    %c0_i32_1 = arith.constant 0 : i32
    return %c0_i32, %c0_i32_0 : i32, i32
  }
  func.func @transform_12(%arg0: i32) -> (i32, i32) {
    %c0_i32 = arith.constant 0 : i32
    %c0_i32_0 = arith.constant 0 : i32
    return %arg0, %c0_i32 : i32, i32
  }
}

</mosaic_0001>

<llo_original>
// kernel: critic_forward.1
$region0: #{critic_forward.1}
  #allocation0 [shape = 'u32[]', space=smem, size = 0x4, offset = 0x4, fixed_abs, tag = 'smem constant byte address 0x4 - core index']
  #allocation1 [shape = 'u32[144,128]{1,0:T(1,128)}', space=vmem, size = 0x12000, scoped, tag = 'internal scratch']
  %s0 = inlined_call_operand.hbm [shape: f32[8,8], index: 0, kind: input, shape index: {}]
  %s1 = inlined_call_operand.hbm [shape: f32[8,16], index: 1, kind: input, shape index: {}]
  %s2 = inlined_call_operand.vmem [shape: f32[8,4], index: 2, kind: input, shape index: {}]
  %s3 = inlined_call_operand.vmem [shape: bf16[8,512], index: 3, kind: input, shape index: {}]
  %s4 = inlined_call_operand.vmem [shape: bf16[16,512], index: 4, kind: input, shape index: {}]
  %s5 = inlined_call_operand.hbm [shape: bf16[4,512], index: 5, kind: input, shape index: {}]
  %s6 = inlined_call_operand.hbm [shape: f32[1,512], index: 6, kind: input, shape index: {}]
  %s7 = inlined_call_operand.hbm [shape: bf16[256,128], index: 7, kind: input, shape index: {}]
  %s8 = inlined_call_operand.hbm [shape: bf16[128,128], index: 8, kind: input, shape index: {}]
  %s9 = inlined_call_operand.vmem [shape: f32[1,128], index: 9, kind: input, shape index: {}]
  %s10 = inlined_call_operand.hbm [shape: bf16[128,128], index: 10, kind: input, shape index: {}]
  %s11 = inlined_call_operand.hbm [shape: f32[1,128], index: 11, kind: input, shape index: {}]
  %s12 = inlined_call_operand.vmem [shape: f32[8,128], index: 12, kind: output, shape index: {}]
  %s13 = sld [smem:[#allocation0]]
  $region90: #{critic_forward.1} parent=0
    _
  %s15 = ssub.s32 1, %s13
  %s16 = scalar_select 0, %s15, %s13
  $region1: #{critic_forward.1} parent=0
    #allocation2 [shape = 'u8[4096]{0}', space=vmem, size = 0x1000, scoped, tag = 'input window, operand 0, single buffered']
    #allocation3 [shape = 's32[1]{0}', space=sflag, size = 0x4, scoped, tag = 'scoped memory for critic_forward.1']
    #allocation4 [shape = 'u8[4096]{0}', space=vmem, size = 0x1000, scoped, tag = 'input window, operand 1, single buffered']
    #allocation5 [shape = 's32[1]{0}', space=sflag, size = 0x4, scoped, tag = 'scoped memory for critic_forward.1']
    #allocation6 [shape = 'u8[4096]{0}', space=vmem, size = 0x1000, scoped, tag = 'input window, operand 5, single buffered']
    #allocation7 [shape = 'u8[2048]{0}', space=vmem, size = 0x800, scoped, tag = 'input window, operand 6, single buffered']
    #allocation8 [shape = 's32[1]{0}', space=sflag, size = 0x4, scoped, tag = 'scoped memory for critic_forward.1']
    #allocation9 [shape = 'u8[65536]{0}', space=vmem, size = 0x10000, scoped, tag = 'input window, operand 7, single buffered']
    #allocation10 [shape = 'u8[32768]{0}', space=vmem, size = 0x8000, scoped, tag = 'input window, operand 8, single buffered']
    #allocation11 [shape = 's32[1]{0}', space=sflag, size = 0x4, scoped, tag = 'scoped memory for critic_forward.1']
    #allocation12 [shape = 'u8[32768]{0}', space=vmem, size = 0x8000, scoped, tag = 'input window, operand 10, single buffered']
    #allocation13 [shape = 'u8[512]{0}', space=vmem, size = 0x400, scoped, tag = 'input window, operand 11, single buffered']
    #allocation14 [shape = 's32[1]{0}', space=sflag, size = 0x4, scoped, tag = 'scoped memory for critic_forward.1']
    %17 = vsyncpa [#allocation3], 0
    %18 = vsyncpa [#allocation5], 0
    %19 = vsyncpa [#allocation8], 0
    %20 = vsyncpa [#allocation11], 0
    %21 = vsyncpa [#allocation14], 0
    // Predicated region
    $region2: #{critic_forward.1} parent=1 // pred_check
      _
    $region3: #{critic_forward.1} parent=1 // pred_check_branch
      %23 = sbr.rel (0) target = $region5
    $region4: #{critic_forward.1} parent=1 // pred_region
      %s25 = ssub.s32 128, 128
      %26 = vsyncadd [#allocation3], %s25
      %s28 = sshll.u32 [#allocation2], 4
      %s29 = int_to_ptr.vmem [resolvable:$true] %s28
      %31 = dma.hbm_to_vmem [thread:$0]  %s0, 128, %s29, [#allocation3]
    $region5: #{critic_forward.1} parent=1 // pred_fallthru
      _
    // Predicated region
    $region6: #{critic_forward.1} parent=1 // pred_check
      _
    $region7: #{critic_forward.1} parent=1 // pred_check_branch
      %33 = sbr.rel (0) target = $region9
    $region8: #{critic_forward.1} parent=1 // pred_region
      %s35 = ssub.s32 128, 128
      %36 = vsyncadd [#allocation5], %s35
      %s38 = sshll.u32 [#allocation4], 4
      %s39 = int_to_ptr.vmem [resolvable:$true] %s38
      %41 = dma.hbm_to_vmem [thread:$0]  %s1, 128, %s39, [#allocation5]
    $region9: #{critic_forward.1} parent=1 // pred_fallthru
      _
    // Predicated region
    $region10: #{critic_forward.1} parent=1 // pred_check
      _
    $region11: #{critic_forward.1} parent=1 // pred_check_branch
      %43 = sbr.rel (0) target = $region13
    $region12: #{critic_forward.1} parent=1 // pred_region
      _
    $region13: #{critic_forward.1} parent=1 // pred_fallthru
      _
    // Predicated region
    $region14: #{critic_forward.1} parent=1 // pred_check
      _
    $region15: #{critic_forward.1} parent=1 // pred_check_branch
      %45 = sbr.rel (0) target = $region17
    $region16: #{critic_forward.1} parent=1 // pred_region
      _
    $region17: #{critic_forward.1} parent=1 // pred_fallthru
      _
    // Predicated region
    $region18: #{critic_forward.1} parent=1 // pred_check
      _
    $region19: #{critic_forward.1} parent=1 // pred_check_branch
      %47 = sbr.rel (0) target = $region21
    $region20: #{critic_forward.1} parent=1 // pred_region
      _
    $region21: #{critic_forward.1} parent=1 // pred_fallthru
      _
    // Predicated region
    $region22: #{critic_forward.1} parent=1 // pred_check
      _
    $region23: #{critic_forward.1} parent=1 // pred_check_branch
      %49 = sbr.rel (0) target = $region25
    $region24: #{critic_forward.1} parent=1 // pred_region
      %s51 = ssub.s32 128, 128
      %52 = vsyncadd [#allocation5], %s51
      %s54 = sshll.u32 [#allocation6], 4
      %s55 = int_to_ptr.vmem [resolvable:$true] %s54
      %57 = dma.hbm_to_vmem [thread:$0]  %s5, 128, %s55, [#allocation5]
    $region25: #{critic_forward.1} parent=1 // pred_fallthru
      _
    // Predicated region
    $region26: #{critic_forward.1} parent=1 // pred_check
      _
    $region27: #{critic_forward.1} parent=1 // pred_check_branch
      %59 = sbr.rel (0) target = $region29
    $region28: #{critic_forward.1} parent=1 // pred_region
      %s61 = ssub.s32 64, 64
      %62 = vsyncadd [#allocation8], %s61
      %s64 = sshll.u32 [#allocation7], 4
      %s65 = int_to_ptr.vmem [resolvable:$true] %s64
      %67 = dma.hbm_to_vmem [thread:$0]  %s6, 64, %s65, [#allocation8]
    $region29: #{critic_forward.1} parent=1 // pred_fallthru
      _
    // Predicated region
    $region30: #{critic_forward.1} parent=1 // pred_check
      _
    $region31: #{critic_forward.1} parent=1 // pred_check_branch
      %69 = sbr.rel (0) target = $region33
    $region32: #{critic_forward.1} parent=1 // pred_region
      %s71 = ssub.s32 2048, 2048
      %72 = vsyncadd [#allocation8], %s71
      %s73 = sshll.u32 [#allocation9], 4
      %s74 = int_to_ptr.vmem [resolvable:$true] %s73
      %79 = dma.hbm_to_vmem [thread:$0]  %s7, 2048, %s74, [#allocation8], 64, 64, 4
    $region33: #{critic_forward.1} parent=1 // pred_fallthru
      _
    // Predicated region
    $region34: #{critic_forward.1} parent=1 // pred_check
      _
    $region35: #{critic_forward.1} parent=1 // pred_check_branch
      %81 = sbr.rel (0) target = $region37
    $region36: #{critic_forward.1} parent=1 // pred_region
      %s83 = ssub.s32 1024, 1024
      %84 = vsyncadd [#allocation11], %s83
      %s85 = sshll.u32 [#allocation10], 4
      %s86 = int_to_ptr.vmem [resolvable:$true] %s85
      %91 = dma.hbm_to_vmem [thread:$0]  %s8, 1024, %s86, [#allocation11], 64, 64, 4
    $region37: #{critic_forward.1} parent=1 // pred_fallthru
      _
    // Predicated region
    $region38: #{critic_forward.1} parent=1 // pred_check
      _
    $region39: #{critic_forward.1} parent=1 // pred_check_branch
      %93 = sbr.rel (0) target = $region41
    $region40: #{critic_forward.1} parent=1 // pred_region
      _
    $region41: #{critic_forward.1} parent=1 // pred_fallthru
      _
    // Predicated region
    $region42: #{critic_forward.1} parent=1 // pred_check
      _
    $region43: #{critic_forward.1} parent=1 // pred_check_branch
      %95 = sbr.rel (0) target = $region45
    $region44: #{critic_forward.1} parent=1 // pred_region
      %s97 = ssub.s32 1024, 1024
      %98 = vsyncadd [#allocation11], %s97
      %s99 = sshll.u32 [#allocation12], 4
      %s100 = int_to_ptr.vmem [resolvable:$true] %s99
      %105 = dma.hbm_to_vmem [thread:$0]  %s10, 1024, %s100, [#allocation11], 64, 64, 4
    $region45: #{critic_forward.1} parent=1 // pred_fallthru
      _
    // Predicated region
    $region46: #{critic_forward.1} parent=1 // pred_check
      _
    $region47: #{critic_forward.1} parent=1 // pred_check_branch
      %107 = sbr.rel (0) target = $region49
    $region48: #{critic_forward.1} parent=1 // pred_region
      %s109 = ssub.s32 16, 16
      %110 = vsyncadd [#allocation14], %s109
      %s112 = sshll.u32 [#allocation13], 4
      %s113 = int_to_ptr.vmem [resolvable:$true] %s112
      %115 = dma.hbm_to_vmem [thread:$0]  %s11, 16, %s113, [#allocation14]
    $region49: #{critic_forward.1} parent=1 // pred_fallthru
      _
    // Predicated region
    $region50: #{critic_forward.1} parent=1 // pred_check
      _
    $region51: #{critic_forward.1} parent=1 // pred_check_branch
      %117 = sbr.rel (0) target = $region53
    $region52: #{critic_forward.1} parent=1 // pred_region
      %118 = dma.done [#allocation3], 128
    $region53: #{critic_forward.1} parent=1 // pred_fallthru
      _
    // Predicated region
    $region54: #{critic_forward.1} parent=1 // pred_check
      _
    $region55: #{critic_forward.1} parent=1 // pred_check_branch
      %120 = sbr.rel (0) target = $region57
    $region56: #{critic_forward.1} parent=1 // pred_region
      %121 = dma.done [#allocation5], 128
    $region57: #{critic_forward.1} parent=1 // pred_fallthru
      _
    // Predicated region
    $region58: #{critic_forward.1} parent=1 // pred_check
      _
    $region59: #{critic_forward.1} parent=1 // pred_check_branch
      %123 = sbr.rel (0) target = $region61
    $region60: #{critic_forward.1} parent=1 // pred_region
      %124 = dma.done [#allocation5], 128
    $region61: #{critic_forward.1} parent=1 // pred_fallthru
      _
    // Predicated region
    $region62: #{critic_forward.1} parent=1 // pred_check
      _
    $region63: #{critic_forward.1} parent=1 // pred_check_branch
      %126 = sbr.rel (0) target = $region65
    $region64: #{critic_forward.1} parent=1 // pred_region
      %127 = dma.done [#allocation8], 64
    $region65: #{critic_forward.1} parent=1 // pred_fallthru
      _
    // Predicated region
    $region66: #{critic_forward.1} parent=1 // pred_check
      _
    $region67: #{critic_forward.1} parent=1 // pred_check_branch
      %129 = sbr.rel (0) target = $region69
    $region68: #{critic_forward.1} parent=1 // pred_region
      %130 = dma.done [#allocation8], 2048
    $region69: #{critic_forward.1} parent=1 // pred_fallthru
      _
    // Predicated region
    $region70: #{critic_forward.1} parent=1 // pred_check
      _
    $region71: #{critic_forward.1} parent=1 // pred_check_branch
      %132 = sbr.rel (0) target = $region73
    $region72: #{critic_forward.1} parent=1 // pred_region
      %133 = dma.done [#allocation11], 1024
    $region73: #{critic_forward.1} parent=1 // pred_fallthru
      _
    // Predicated region
    $region74: #{critic_forward.1} parent=1 // pred_check
      _
    $region75: #{critic_forward.1} parent=1 // pred_check_branch
      %135 = sbr.rel (0) target = $region77
    $region76: #{critic_forward.1} parent=1 // pred_region
      %136 = dma.done [#allocation11], 1024
    $region77: #{critic_forward.1} parent=1 // pred_fallthru
      _
    // Predicated region
    $region78: #{critic_forward.1} parent=1 // pred_check
      _
    $region79: #{critic_forward.1} parent=1 // pred_check_branch
      %138 = sbr.rel (0) target = $region81
    $region80: #{critic_forward.1} parent=1 // pred_region
      %139 = dma.done [#allocation14], 16
    $region81: #{critic_forward.1} parent=1 // pred_fallthru
      _
    %v141 = vld [vmem:[#allocation2] sm:$0xff]
    %v142 = vpack.c.bf16 %v141, %v141
    %v143 = vld [vmem:[#allocation4] sm:$0xff]
    %v144 = vpack.c.bf16 %v143, %v143
    %v145 = vld [vmem:[%s2] sm:$0xff]
    %v146 = vpack.c.bf16 %v145, %v145
    %v147 = vld [vmem:[%s3] sm:$0xff]
    %v148 = vld [vmem:[%s3 + $0x8] sm:$0xff]
    %v149 = vld [vmem:[%s4] sm:$0xff]
    %v150 = vld [vmem:[%s4 + $0x8] sm:$0xff]
    %v151 = vld [vmem:[%s4 + $0x10] sm:$0xff]
    %v152 = vld [vmem:[%s4 + $0x18] sm:$0xff]
    %v157 = vunpack.c.l.b16 %v149
    %v158 = vunpack.c.h.b16 %v149
    %v159 = vunpack.c.l.b16 %v150
    %v160 = vunpack.c.h.b16 %v150
    %v161 = vunpack.c.l.b16 %v151
    %v162 = vunpack.c.h.b16 %v151
    %v163 = vunpack.c.l.b16 %v152
    %v164 = vunpack.c.h.b16 %v152
    %v165 = vpack.c.b16 %v161, %v157
    %v166 = vpack.c.b16 %v162, %v158
    %v167 = vpack.c.b16 %v163, %v159
    %v168 = vpack.c.b16 %v164, %v160
    %vm173 = vcmask 130048
    %v175 = vsel %vm173, %v144, 0
    %177 = vmatprep.subr.bf16.mxu0 %v166
    %178 = vmatpush1.bf16.msra.mxu0 %v165
    %179 = vmatprep.subr.bf16.mxu0 0
    %180 = vmatpush1.bf16.msra.mxu0 0
    %181 = vmatprep.subr.bf16.mxu0 0
    %182 = vmatpush1.bf16.msra.mxu0 0
    %183 = vmatprep.subr.bf16.mxu0 0
    %184 = vmatpush1.bf16.msra.mxu0 0
    %185 = vmatprep.subr.bf16.mxu0 0
    %186 = vmatpush1.bf16.msra.mxu0 0
    %187 = vmatprep.subr.bf16.mxu0 0
    %188 = vmatpush1.bf16.msra.mxu0 0
    %189 = vmatprep.subr.bf16.mxu0 0
    %190 = vmatpush1.bf16.msra.mxu0 0
    %191 = vmatprep.subr.bf16.mxu0 0
    %192 = vmatpush1.bf16.msra.mxu0 0
    %193 = vmatprep.subr.bf16.mxu0 0
    %194 = vmatpush1.bf16.msra.mxu0 0
    %195 = vmatprep.subr.bf16.mxu0 0
    %196 = vmatpush1.bf16.msra.mxu0 0
    %197 = vmatprep.subr.bf16.mxu0 0
    %198 = vmatpush1.bf16.msra.mxu0 0
    %199 = vmatprep.subr.bf16.mxu0 0
    %200 = vmatpush1.bf16.msra.mxu0 0
    %201 = vmatprep.subr.bf16.mxu0 0
    %202 = vmatpush1.bf16.msra.mxu0 0
    %203 = vmatprep.subr.bf16.mxu0 0
    %204 = vmatpush1.bf16.msra.mxu0 0
    %205 = vmatprep.subr.bf16.mxu0 0
    %206 = vmatpush1.bf16.msra.mxu0 0
    %207 = vmatprep.subr.bf16.mxu0 0
    %208 = vmatpush1.bf16.msra.mxu0 0
    %209 = vmatprep.mubr.bf16.mxu0 0
    %210 = vmatmul.mubr.bf16.gmra.mrb[0].mxu0 %v175
    %v211 = vpop.f32.mrb[0].mxu0
    %v212 = vadd.f32 0.0, %v211
    %v213 = vpop.f32.mrb[0].mxu0
    %v214 = vadd.f32 0.0, %v213
    %v215 = vpop.f32.mrb[0].mxu0
    %v216 = vpop.f32.mrb[0].mxu0
    %217 = vdwg.mxu0
    %218 = vmatprep.subr.bf16.mxu0 %v168
    %219 = vmatpush1.bf16.msra.mxu0 %v167
    %220 = vmatprep.subr.bf16.mxu0 0
    %221 = vmatpush1.bf16.msra.mxu0 0
    %222 = vmatprep.subr.bf16.mxu0 0
    %223 = vmatpush1.bf16.msra.mxu0 0
    %224 = vmatprep.subr.bf16.mxu0 0
    %225 = vmatpush1.bf16.msra.mxu0 0
    %226 = vmatprep.subr.bf16.mxu0 0
    %227 = vmatpush1.bf16.msra.mxu0 0
    %228 = vmatprep.subr.bf16.mxu0 0
    %229 = vmatpush1.bf16.msra.mxu0 0
    %230 = vmatprep.subr.bf16.mxu0 0
    %231 = vmatpush1.bf16.msra.mxu0 0
    %232 = vmatprep.subr.bf16.mxu0 0
    %233 = vmatpush1.bf16.msra.mxu0 0
    %234 = vmatprep.subr.bf16.mxu0 0
    %235 = vmatpush1.bf16.msra.mxu0 0
    %236 = vmatprep.subr.bf16.mxu0 0
    %237 = vmatpush1.bf16.msra.mxu0 0
    %238 = vmatprep.subr.bf16.mxu0 0
    %239 = vmatpush1.bf16.msra.mxu0 0
    %240 = vmatprep.subr.bf16.mxu0 0
    %241 = vmatpush1.bf16.msra.mxu0 0
    %242 = vmatprep.subr.bf16.mxu0 0
    %243 = vmatpush1.bf16.msra.mxu0 0
    %244 = vmatprep.subr.bf16.mxu0 0
    %245 = vmatpush1.bf16.msra.mxu0 0
    %246 = vmatprep.subr.bf16.mxu0 0
    %247 = vmatpush1.bf16.msra.mxu0 0
    %248 = vmatprep.subr.bf16.mxu0 0
    %249 = vmatpush1.bf16.msra.mxu0 0
    %250 = vmatprep.mubr.bf16.mxu0 0
    %251 = vmatmul.mubr.bf16.gmra.mrb[0].mxu0 %v175
    %v252 = vpop.f32.mrb[0].mxu0
    %v253 = vadd.f32 0.0, %v252
    %v254 = vpop.f32.mrb[0].mxu0
    %v255 = vadd.f32 0.0, %v254
    %v256 = vpop.f32.mrb[0].mxu0
    %v257 = vpop.f32.mrb[0].mxu0
    %258 = vdwg.mxu0
    %v261 = vunpack.c.l.b16 %v147
    %v262 = vunpack.c.h.b16 %v147
    %v263 = vunpack.c.l.b16 %v148
    %v264 = vunpack.c.h.b16 %v148
    %v265 = vpack.c.b16 %v261, %v261
    %v266 = vpack.c.b16 %v262, %v262
    %v267 = vpack.c.b16 %v263, %v263
    %v268 = vpack.c.b16 %v264, %v264
    %vm269 = vcmask 64512
    %v271 = vsel %vm269, %v142, 0
    %vm273 = vcmask 1043456
    %v275 = vsel %vm273, %v265, 0
    %v278 = vsel %vm273, %v266, 0
    %v281 = vsel %vm273, %v267, 0
    %v284 = vsel %vm273, %v268, 0
    %286 = vmatprep.subr.bf16.mxu0 %v278
    %287 = vmatpush1.bf16.msra.mxu0 %v275
    %288 = vmatprep.subr.bf16.mxu0 0
    %289 = vmatpush1.bf16.msra.mxu0 0
    %290 = vmatprep.subr.bf16.mxu0 0
    %291 = vmatpush1.bf16.msra.mxu0 0
    %292 = vmatprep.subr.bf16.mxu0 0
    %293 = vmatpush1.bf16.msra.mxu0 0
    %294 = vmatprep.subr.bf16.mxu0 0
    %295 = vmatpush1.bf16.msra.mxu0 0
    %296 = vmatprep.subr.bf16.mxu0 0
    %297 = vmatpush1.bf16.msra.mxu0 0
    %298 = vmatprep.subr.bf16.mxu0 0
    %299 = vmatpush1.bf16.msra.mxu0 0
    %300 = vmatprep.subr.bf16.mxu0 0
    %301 = vmatpush1.bf16.msra.mxu0 0
    %302 = vmatprep.subr.bf16.mxu0 0
    %303 = vmatpush1.bf16.msra.mxu0 0
    %304 = vmatprep.subr.bf16.mxu0 0
    %305 = vmatpush1.bf16.msra.mxu0 0
    %306 = vmatprep.subr.bf16.mxu0 0
    %307 = vmatpush1.bf16.msra.mxu0 0
    %308 = vmatprep.subr.bf16.mxu0 0
    %309 = vmatpush1.bf16.msra.mxu0 0
    %310 = vmatprep.subr.bf16.mxu0 0
    %311 = vmatpush1.bf16.msra.mxu0 0
    %312 = vmatprep.subr.bf16.mxu0 0
    %313 = vmatpush1.bf16.msra.mxu0 0
    %314 = vmatprep.subr.bf16.mxu0 0
    %315 = vmatpush1.bf16.msra.mxu0 0
    %316 = vmatprep.subr.bf16.mxu0 0
    %317 = vmatpush1.bf16.msra.mxu0 0
    %318 = vmatprep.mubr.bf16.mxu0 0
    %319 = vmatmul.mubr.bf16.gmra.mrb[0].mxu0 %v271
    %v320 = vpop.f32.mrb[0].mxu0
    %v321 = vadd.f32 %v212, %v320
    %v322 = vpop.f32.mrb[0].mxu0
    %v323 = vadd.f32 %v214, %v322
    %v324 = vpop.f32.mrb[0].mxu0
    %v325 = vpop.f32.mrb[0].mxu0
    %326 = vdwg.mxu0
    %327 = vmatprep.subr.bf16.mxu0 %v284
    %328 = vmatpush1.bf16.msra.mxu0 %v281
    %329 = vmatprep.subr.bf16.mxu0 0
    %330 = vmatpush1.bf16.msra.mxu0 0
    %331 = vmatprep.subr.bf16.mxu0 0
    %332 = vmatpush1.bf16.msra.mxu0 0
    %333 = vmatprep.subr.bf16.mxu0 0
    %334 = vmatpush1.bf16.msra.mxu0 0
    %335 = vmatprep.subr.bf16.mxu0 0
    %336 = vmatpush1.bf16.msra.mxu0 0
    %337 = vmatprep.subr.bf16.mxu0 0
    %338 = vmatpush1.bf16.msra.mxu0 0
    %339 = vmatprep.subr.bf16.mxu0 0
    %340 = vmatpush1.bf16.msra.mxu0 0
    %341 = vmatprep.subr.bf16.mxu0 0
    %342 = vmatpush1.bf16.msra.mxu0 0
    %343 = vmatprep.subr.bf16.mxu0 0
    %344 = vmatpush1.bf16.msra.mxu0 0
    %345 = vmatprep.subr.bf16.mxu0 0
    %346 = vmatpush1.bf16.msra.mxu0 0
    %347 = vmatprep.subr.bf16.mxu0 0
    %348 = vmatpush1.bf16.msra.mxu0 0
    %349 = vmatprep.subr.bf16.mxu0 0
    %350 = vmatpush1.bf16.msra.mxu0 0
    %351 = vmatprep.subr.bf16.mxu0 0
    %352 = vmatpush1.bf16.msra.mxu0 0
    %353 = vmatprep.subr.bf16.mxu0 0
    %354 = vmatpush1.bf16.msra.mxu0 0
    %355 = vmatprep.subr.bf16.mxu0 0
    %356 = vmatpush1.bf16.msra.mxu0 0
    %357 = vmatprep.subr.bf16.mxu0 0
    %358 = vmatpush1.bf16.msra.mxu0 0
    %359 = vmatprep.mubr.bf16.mxu0 0
    %360 = vmatmul.mubr.bf16.gmra.mrb[0].mxu0 %v271
    %v361 = vpop.f32.mrb[0].mxu0
    %v362 = vadd.f32 %v253, %v361
    %v363 = vpop.f32.mrb[0].mxu0
    %v364 = vadd.f32 %v255, %v363
    %v365 = vpop.f32.mrb[0].mxu0
    %v366 = vpop.f32.mrb[0].mxu0
    %367 = vdwg.mxu0
    %v368 = vld [vmem:[#allocation6] sm:$0xff]
    %v370 = vcombine.high %v368, %v368
    %v372 = vunpack.c.l.s4 1983009808
    %v373 = vunpack.c.0.s8 %v372
    %v374 = vlaneseq
    %v375 = vshrl.u32 %v374, 7
    %v376 = vsub.s32 %v373, %v375
    %v377 = vrot.slane %v368, %v376
    %v379 = vunpack.c.l.s4 1983009808
    %v380 = vunpack.c.0.s8 %v379
    %v381 = vlaneseq
    %v382 = vshrl.u32 %v381, 7
    %v383 = vsub.s32 %v380, %v382
    %v384 = vrot.slane %v370, %v383
    %v385 = vcombine.high %v377, %v377
    %v386 = vcombine.high %v384, %v384
    %vm387 = vcmask 31744
    %v389 = vsel %vm387, %v146, 0
    %vm391 = vcmask 1041408
    %v393 = vsel %vm391, %v377, 0
    %v396 = vsel %vm391, %v385, 0
    %v399 = vsel %vm391, %v384, 0
    %v402 = vsel %vm391, %v386, 0
    %404 = vmatprep.subr.bf16.mxu0 %v396
    %405 = vmatpush1.bf16.msra.mxu0 %v393
    %406 = vmatprep.subr.bf16.mxu0 0
    %407 = vmatpush1.bf16.msra.mxu0 0
    %408 = vmatprep.subr.bf16.mxu0 0
    %409 = vmatpush1.bf16.msra.mxu0 0
    %410 = vmatprep.subr.bf16.mxu0 0
    %411 = vmatpush1.bf16.msra.mxu0 0
    %412 = vmatprep.subr.bf16.mxu0 0
    %413 = vmatpush1.bf16.msra.mxu0 0
    %414 = vmatprep.subr.bf16.mxu0 0
    %415 = vmatpush1.bf16.msra.mxu0 0
    %416 = vmatprep.subr.bf16.mxu0 0
    %417 = vmatpush1.bf16.msra.mxu0 0
    %418 = vmatprep.subr.bf16.mxu0 0
    %419 = vmatpush1.bf16.msra.mxu0 0
    %420 = vmatprep.subr.bf16.mxu0 0
    %421 = vmatpush1.bf16.msra.mxu0 0
    %422 = vmatprep.subr.bf16.mxu0 0
    %423 = vmatpush1.bf16.msra.mxu0 0
    %424 = vmatprep.subr.bf16.mxu0 0
    %425 = vmatpush1.bf16.msra.mxu0 0
    %426 = vmatprep.subr.bf16.mxu0 0
    %427 = vmatpush1.bf16.msra.mxu0 0
    %428 = vmatprep.subr.bf16.mxu0 0
    %429 = vmatpush1.bf16.msra.mxu0 0
    %430 = vmatprep.subr.bf16.mxu0 0
    %431 = vmatpush1.bf16.msra.mxu0 0
    %432 = vmatprep.subr.bf16.mxu0 0
    %433 = vmatpush1.bf16.msra.mxu0 0
    %434 = vmatprep.subr.bf16.mxu0 0
    %435 = vmatpush1.bf16.msra.mxu0 0
    %436 = vmatprep.mubr.bf16.mxu0 0
    %437 = vmatmul.mubr.bf16.gmra.mrb[0].mxu0 %v389
    %v438 = vpop.f32.mrb[0].mxu0
    %v439 = vadd.f32 0.0, %v438
    %v440 = vpop.f32.mrb[0].mxu0
    %v441 = vadd.f32 0.0, %v440
    %v442 = vpop.f32.mrb[0].mxu0
    %v443 = vpop.f32.mrb[0].mxu0
    %444 = vdwg.mxu0
    %445 = vmatprep.subr.bf16.mxu0 %v402
    %446 = vmatpush1.bf16.msra.mxu0 %v399
    %447 = vmatprep.subr.bf16.mxu0 0
    %448 = vmatpush1.bf16.msra.mxu0 0
    %449 = vmatprep.subr.bf16.mxu0 0
    %450 = vmatpush1.bf16.msra.mxu0 0
    %451 = vmatprep.subr.bf16.mxu0 0
    %452 = vmatpush1.bf16.msra.mxu0 0
    %453 = vmatprep.subr.bf16.mxu0 0
    %454 = vmatpush1.bf16.msra.mxu0 0
    %455 = vmatprep.subr.bf16.mxu0 0
    %456 = vmatpush1.bf16.msra.mxu0 0
    %457 = vmatprep.subr.bf16.mxu0 0
    %458 = vmatpush1.bf16.msra.mxu0 0
    %459 = vmatprep.subr.bf16.mxu0 0
    %460 = vmatpush1.bf16.msra.mxu0 0
    %461 = vmatprep.subr.bf16.mxu0 0
    %462 = vmatpush1.bf16.msra.mxu0 0
    %463 = vmatprep.subr.bf16.mxu0 0
    %464 = vmatpush1.bf16.msra.mxu0 0
    %465 = vmatprep.subr.bf16.mxu0 0
    %466 = vmatpush1.bf16.msra.mxu0 0
    %467 = vmatprep.subr.bf16.mxu0 0
    %468 = vmatpush1.bf16.msra.mxu0 0
    %469 = vmatprep.subr.bf16.mxu0 0
    %470 = vmatpush1.bf16.msra.mxu0 0
    %471 = vmatprep.subr.bf16.mxu0 0
    %472 = vmatpush1.bf16.msra.mxu0 0
    %473 = vmatprep.subr.bf16.mxu0 0
    %474 = vmatpush1.bf16.msra.mxu0 0
    %475 = vmatprep.subr.bf16.mxu0 0
    %476 = vmatpush1.bf16.msra.mxu0 0
    %477 = vmatprep.mubr.bf16.mxu0 0
    %478 = vmatmul.mubr.bf16.gmra.mrb[0].mxu0 %v389
    %v479 = vpop.f32.mrb[0].mxu0
    %v480 = vadd.f32 0.0, %v479
    %v481 = vpop.f32.mrb[0].mxu0
    %v482 = vadd.f32 0.0, %v481
    %v483 = vpop.f32.mrb[0].mxu0
    %v484 = vpop.f32.mrb[0].mxu0
    %485 = vdwg.mxu0
    %v486 = vadd.f32 %v321, %v439
    %v487 = vadd.f32 %v323, %v441
    %v488 = vadd.f32 %v362, %v480
    %v489 = vadd.f32 %v364, %v482
    %v490 = vld [vmem:[#allocation7] sm:$0xf]
    %v492 = vlaneseq
    %v493 = vshrl.u32 %v492, 7
    %v494 = vsub.s32 0, %v493
    %v495 = vrot.slane %v490, %v494
    %v496 = vlaneseq
    %v497 = vshrl.u32 %v496, 7
    %v498 = vsub.s32 1, %v497
    %v499 = vrot.slane %v490, %v498
    %v500 = vlaneseq
    %v501 = vshrl.u32 %v500, 7
    %v502 = vsub.s32 2, %v501
    %v503 = vrot.slane %v490, %v502
    %v504 = vlaneseq
    %v505 = vshrl.u32 %v504, 7
    %v506 = vsub.s32 3, %v505
    %v507 = vrot.slane %v490, %v506
    %v512 = vadd.f32 %v486, %v495
    %v513 = vadd.f32 %v487, %v499
    %v514 = vadd.f32 %v488, %v503
    %v515 = vadd.f32 %v489, %v507
    %v516 = vmax.f32 %v512, 0.0
    %v517 = vmax.f32 %v514, 0.0
    %518 = vmax.xlane.f32.xlu0 %v513
    %v519 = vpop.xlane.xlu0 %518
    %v520 = vsub.f32 %v513, %v519
    %v521 = vmul.f32 %v520, 1.442695
    %v522 = vpow.pop %v521
    %523 = vadd.xlane.f32.xlu0 %v522
    %v524 = vpop.xlane.xlu0 %523
    %v525 = vrcp.pop %v524
    %v526 = vmul.f32 %v522, %v525
    %v527 = vmul.f32 %v526, %v517
    %v528 = vpack.c.bf16 %v516, %v516
    %v529 = vpack.c.bf16 %v527, %v527
    %v530 = vld [vmem:[#allocation9] sm:$0xf]
    %v531 = vld [vmem:[#allocation9 + $0x4] sm:$0xf]
    %v532 = vld [vmem:[#allocation9 + $0x8] sm:$0xf]
    %v533 = vld [vmem:[#allocation9 + $0xc] sm:$0xf]
    %v534 = vld [vmem:[#allocation9 + $0x10] sm:$0xf]
    %v535 = vld [vmem:[#allocation9 + $0x14] sm:$0xf]
    %v536 = vld [vmem:[#allocation9 + $0x18] sm:$0xf]
    %v537 = vld [vmem:[#allocation9 + $0x1c] sm:$0xf]
    %v538 = vld [vmem:[#allocation9 + $0x20] sm:$0xf]
    %v539 = vld [vmem:[#allocation9 + $0x24] sm:$0xf]
    %v540 = vld [vmem:[#allocation9 + $0x28] sm:$0xf]
    %v541 = vld [vmem:[#allocation9 + $0x2c] sm:$0xf]
    %v542 = vld [vmem:[#allocation9 + $0x30] sm:$0xf]
    %v543 = vld [vmem:[#allocation9 + $0x34] sm:$0xf]
    %v544 = vld [vmem:[#allocation9 + $0x38] sm:$0xf]
    %v545 = vld [vmem:[#allocation9 + $0x3c] sm:$0xf]
    %v546 = vld [vmem:[#allocation9 + $0x40] sm:$0xf]
    %v547 = vld [vmem:[#allocation9 + $0x44] sm:$0xf]
    %v548 = vld [vmem:[#allocation9 + $0x48] sm:$0xf]
    %v549 = vld [vmem:[#allocation9 + $0x4c] sm:$0xf]
    %v550 = vld [vmem:[#allocation9 + $0x50] sm:$0xf]
    %v551 = vld [vmem:[#allocation9 + $0x54] sm:$0xf]
    %v552 = vld [vmem:[#allocation9 + $0x58] sm:$0xf]
    %v553 = vld [vmem:[#allocation9 + $0x5c] sm:$0xf]
    %v554 = vld [vmem:[#allocation9 + $0x60] sm:$0xf]
    %v555 = vld [vmem:[#allocation9 + $0x64] sm:$0xf]
    %v556 = vld [vmem:[#allocation9 + $0x68] sm:$0xf]
    %v557 = vld [vmem:[#allocation9 + $0x6c] sm:$0xf]
    %v558 = vld [vmem:[#allocation9 + $0x70] sm:$0xf]
    %v559 = vld [vmem:[#allocation9 + $0x74] sm:$0xf]
    %v560 = vld [vmem:[#allocation9 + $0x78] sm:$0xf]
    %v561 = vld [vmem:[#allocation9 + $0x7c] sm:$0xf]
    %v594 = vunpack.c.l.b16 %v530
    %v595 = vunpack.c.l.b16 %v531
    %v596 = vunpack.c.l.b16 %v532
    %v597 = vunpack.c.l.b16 %v533
    %v598 = vunpack.c.l.b16 %v534
    %v599 = vunpack.c.l.b16 %v535
    %v600 = vunpack.c.l.b16 %v536
    %v601 = vunpack.c.l.b16 %v537
    %v602 = vunpack.c.l.b16 %v538
    %v603 = vunpack.c.l.b16 %v539
    %v604 = vunpack.c.l.b16 %v540
    %v605 = vunpack.c.l.b16 %v541
    %v606 = vunpack.c.l.b16 %v542
    %v607 = vunpack.c.l.b16 %v543
    %v608 = vunpack.c.l.b16 %v544
    %v609 = vunpack.c.l.b16 %v545
    %v610 = vunpack.c.l.b16 %v546
    %v611 = vunpack.c.l.b16 %v547
    %v612 = vunpack.c.l.b16 %v548
    %v613 = vunpack.c.l.b16 %v549
    %v614 = vunpack.c.l.b16 %v550
    %v615 = vunpack.c.l.b16 %v551
    %v616 = vunpack.c.l.b16 %v552
    %v617 = vunpack.c.l.b16 %v553
    %v618 = vunpack.c.l.b16 %v554
    %v619 = vunpack.c.l.b16 %v555
    %v620 = vunpack.c.l.b16 %v556
    %v621 = vunpack.c.l.b16 %v557
    %v622 = vunpack.c.l.b16 %v558
    %v623 = vunpack.c.l.b16 %v559
    %v624 = vunpack.c.l.b16 %v560
    %v625 = vunpack.c.l.b16 %v561
    %v626 = vpack.c.b16 %v595, %v594
    %v627 = vpack.c.b16 %v597, %v596
    %v628 = vpack.c.b16 %v599, %v598
    %v629 = vpack.c.b16 %v601, %v600
    %v630 = vpack.c.b16 %v603, %v602
    %v631 = vpack.c.b16 %v605, %v604
    %v632 = vpack.c.b16 %v607, %v606
    %v633 = vpack.c.b16 %v609, %v608
    %v634 = vpack.c.b16 %v611, %v610
    %v635 = vpack.c.b16 %v613, %v612
    %v636 = vpack.c.b16 %v615, %v614
    %v637 = vpack.c.b16 %v617, %v616
    %v638 = vpack.c.b16 %v619, %v618
    %v639 = vpack.c.b16 %v621, %v620
    %v640 = vpack.c.b16 %v623, %v622
    %v641 = vpack.c.b16 %v625, %v624
    %658 = vmatprep.subr.bf16.mxu0 0
    %659 = vmatpush1.bf16.msra.mxu0 %v626
    %660 = vmatprep.subr.bf16.mxu0 0
    %661 = vmatpush1.bf16.msra.mxu0 %v627
    %662 = vmatprep.subr.bf16.mxu0 0
    %663 = vmatpush1.bf16.msra.mxu0 %v628
    %664 = vmatprep.subr.bf16.mxu0 0
    %665 = vmatpush1.bf16.msra.mxu0 %v629
    %666 = vmatprep.subr.bf16.mxu0 0
    %667 = vmatpush1.bf16.msra.mxu0 %v630
    %668 = vmatprep.subr.bf16.mxu0 0
    %669 = vmatpush1.bf16.msra.mxu0 %v631
    %670 = vmatprep.subr.bf16.mxu0 0
    %671 = vmatpush1.bf16.msra.mxu0 %v632
    %672 = vmatprep.subr.bf16.mxu0 0
    %673 = vmatpush1.bf16.msra.mxu0 %v633
    %674 = vmatprep.subr.bf16.mxu0 0
    %675 = vmatpush1.bf16.msra.mxu0 %v634
    %676 = vmatprep.subr.bf16.mxu0 0
    %677 = vmatpush1.bf16.msra.mxu0 %v635
    %678 = vmatprep.subr.bf16.mxu0 0
    %679 = vmatpush1.bf16.msra.mxu0 %v636
    %680 = vmatprep.subr.bf16.mxu0 0
    %681 = vmatpush1.bf16.msra.mxu0 %v637
    %682 = vmatprep.subr.bf16.mxu0 0
    %683 = vmatpush1.bf16.msra.mxu0 %v638
    %684 = vmatprep.subr.bf16.mxu0 0
    %685 = vmatpush1.bf16.msra.mxu0 %v639
    %686 = vmatprep.subr.bf16.mxu0 0
    %687 = vmatpush1.bf16.msra.mxu0 %v640
    %688 = vmatprep.subr.bf16.mxu0 0
    %689 = vmatpush1.bf16.msra.mxu0 %v641
    %690 = vmatprep.mubr.bf16.mxu0 %v529
    %691 = vmatmul.mubr.bf16.gmra.mrb[0].mxu0 %v528
    %v692 = vpop.f32.mrb[0].mxu0
    %v693 = vadd.f32 %v515, %v692
    %v694 = vpop.f32.mrb[0].mxu0
    %v695 = vpop.f32.mrb[0].mxu0
    %v696 = vpop.f32.mrb[0].mxu0
    %697 = vdwg.mxu0
    %v698 = vmax.f32 %v693, 0.0
    %v699 = vpack.c.bf16 %v698, %v698
    %v700 = vld [vmem:[#allocation10] sm:$0xf]
    %v701 = vld [vmem:[#allocation10 + $0x4] sm:$0xf]
    %v702 = vld [vmem:[#allocation10 + $0x8] sm:$0xf]
    %v703 = vld [vmem:[#allocation10 + $0xc] sm:$0xf]
    %v704 = vld [vmem:[#allocation10 + $0x10] sm:$0xf]
    %v705 = vld [vmem:[#allocation10 + $0x14] sm:$0xf]
    %v706 = vld [vmem:[#allocation10 + $0x18] sm:$0xf]
    %v707 = vld [vmem:[#allocation10 + $0x1c] sm:$0xf]
    %v708 = vld [vmem:[#allocation10 + $0x20] sm:$0xf]
    %v709 = vld [vmem:[#allocation10 + $0x24] sm:$0xf]
    %v710 = vld [vmem:[#allocation10 + $0x28] sm:$0xf]
    %v711 = vld [vmem:[#allocation10 + $0x2c] sm:$0xf]
    %v712 = vld [vmem:[#allocation10 + $0x30] sm:$0xf]
    %v713 = vld [vmem:[#allocation10 + $0x34] sm:$0xf]
    %v714 = vld [vmem:[#allocation10 + $0x38] sm:$0xf]
    %v715 = vld [vmem:[#allocation10 + $0x3c] sm:$0xf]
    %v716 = vld [vmem:[%s9] sm:$0x1]
    %v718 = vlaneseq
    %v719 = vshrl.u32 %v718, 7
    %v720 = vsub.s32 0, %v719
    %v721 = vrot.slane %v716, %v720
    %v739 = vunpack.c.l.b16 %v700
    %v740 = vunpack.c.l.b16 %v701
    %v741 = vunpack.c.l.b16 %v702
    %v742 = vunpack.c.l.b16 %v703
    %v743 = vunpack.c.l.b16 %v704
    %v744 = vunpack.c.l.b16 %v705
    %v745 = vunpack.c.l.b16 %v706
    %v746 = vunpack.c.l.b16 %v707
    %v747 = vunpack.c.l.b16 %v708
    %v748 = vunpack.c.l.b16 %v709
    %v749 = vunpack.c.l.b16 %v710
    %v750 = vunpack.c.l.b16 %v711
    %v751 = vunpack.c.l.b16 %v712
    %v752 = vunpack.c.l.b16 %v713
    %v753 = vunpack.c.l.b16 %v714
    %v754 = vunpack.c.l.b16 %v715
    %v755 = vpack.c.b16 %v740, %v739
    %v756 = vpack.c.b16 %v742, %v741
    %v757 = vpack.c.b16 %v744, %v743
    %v758 = vpack.c.b16 %v746, %v745
    %v759 = vpack.c.b16 %v748, %v747
    %v760 = vpack.c.b16 %v750, %v749
    %v761 = vpack.c.b16 %v752, %v751
    %v762 = vpack.c.b16 %v754, %v753
    %771 = vmatprep.subr.bf16.mxu0 0
    %772 = vmatpush1.bf16.msra.mxu0 %v755
    %773 = vmatprep.subr.bf16.mxu0 0
    %774 = vmatpush1.bf16.msra.mxu0 %v756
    %775 = vmatprep.subr.bf16.mxu0 0
    %776 = vmatpush1.bf16.msra.mxu0 %v757
    %777 = vmatprep.subr.bf16.mxu0 0
    %778 = vmatpush1.bf16.msra.mxu0 %v758
    %779 = vmatprep.subr.bf16.mxu0 0
    %780 = vmatpush1.bf16.msra.mxu0 %v759
    %781 = vmatprep.subr.bf16.mxu0 0
    %782 = vmatpush1.bf16.msra.mxu0 %v760
    %783 = vmatprep.subr.bf16.mxu0 0
    %784 = vmatpush1.bf16.msra.mxu0 %v761
    %785 = vmatprep.subr.bf16.mxu0 0
    %786 = vmatpush1.bf16.msra.mxu0 %v762
    %787 = vmatprep.subr.bf16.mxu0 0
    %788 = vmatpush1.bf16.msra.mxu0 0
    %789 = vmatprep.subr.bf16.mxu0 0
    %790 = vmatpush1.bf16.msra.mxu0 0
    %791 = vmatprep.subr.bf16.mxu0 0
    %792 = vmatpush1.bf16.msra.mxu0 0
    %793 = vmatprep.subr.bf16.mxu0 0
    %794 = vmatpush1.bf16.msra.mxu0 0
    %795 = vmatprep.subr.bf16.mxu0 0
    %796 = vmatpush1.bf16.msra.mxu0 0
    %797 = vmatprep.subr.bf16.mxu0 0
    %798 = vmatpush1.bf16.msra.mxu0 0
    %799 = vmatprep.subr.bf16.mxu0 0
    %800 = vmatpush1.bf16.msra.mxu0 0
    %801 = vmatprep.subr.bf16.mxu0 0
    %802 = vmatpush1.bf16.msra.mxu0 0
    %803 = vmatprep.mubr.bf16.mxu0 0
    %804 = vmatmul.mubr.bf16.gmra.mrb[0].mxu0 %v699
    %v805 = vpop.f32.mrb[0].mxu0
    %v806 = vadd.f32 %v721, %v805
    %v807 = vpop.f32.mrb[0].mxu0
    %v808 = vpop.f32.mrb[0].mxu0
    %v809 = vpop.f32.mrb[0].mxu0
    %810 = vdwg.mxu0
    %v811 = vmax.f32 %v806, 0.0
    %v812 = vpack.c.bf16 %v811, %v811
    %v813 = vld [vmem:[#allocation12] sm:$0xf]
    %v814 = vld [vmem:[#allocation12 + $0x4] sm:$0xf]
    %v815 = vld [vmem:[#allocation12 + $0x8] sm:$0xf]
    %v816 = vld [vmem:[#allocation12 + $0xc] sm:$0xf]
    %v817 = vld [vmem:[#allocation12 + $0x10] sm:$0xf]
    %v818 = vld [vmem:[#allocation12 + $0x14] sm:$0xf]
    %v819 = vld [vmem:[#allocation12 + $0x18] sm:$0xf]
    %v820 = vld [vmem:[#allocation12 + $0x1c] sm:$0xf]
    %v821 = vld [vmem:[#allocation12 + $0x20] sm:$0xf]
    %v822 = vld [vmem:[#allocation12 + $0x24] sm:$0xf]
    %v823 = vld [vmem:[#allocation12 + $0x28] sm:$0xf]
    %v824 = vld [vmem:[#allocation12 + $0x2c] sm:$0xf]
    %v825 = vld [vmem:[#allocation12 + $0x30] sm:$0xf]
    %v826 = vld [vmem:[#allocation12 + $0x34] sm:$0xf]
    %v827 = vld [vmem:[#allocation12 + $0x38] sm:$0xf]
    %v828 = vld [vmem:[#allocation12 + $0x3c] sm:$0xf]
    %v829 = vld [vmem:[#allocation13] sm:$0x1]
    %v831 = vlaneseq
    %v832 = vshrl.u32 %v831, 7
    %v833 = vsub.s32 0, %v832
    %v834 = vrot.slane %v829, %v833
    %v852 = vunpack.c.l.b16 %v813
    %v853 = vunpack.c.l.b16 %v814
    %v854 = vunpack.c.l.b16 %v815
    %v855 = vunpack.c.l.b16 %v816
    %v856 = vunpack.c.l.b16 %v817
    %v857 = vunpack.c.l.b16 %v818
    %v858 = vunpack.c.l.b16 %v819
    %v859 = vunpack.c.l.b16 %v820
    %v860 = vunpack.c.l.b16 %v821
    %v861 = vunpack.c.l.b16 %v822
    %v862 = vunpack.c.l.b16 %v823
    %v863 = vunpack.c.l.b16 %v824
    %v864 = vunpack.c.l.b16 %v825
    %v865 = vunpack.c.l.b16 %v826
    %v866 = vunpack.c.l.b16 %v827
    %v867 = vunpack.c.l.b16 %v828
    %v868 = vpack.c.b16 %v853, %v852
    %v869 = vpack.c.b16 %v855, %v854
    %v870 = vpack.c.b16 %v857, %v856
    %v871 = vpack.c.b16 %v859, %v858
    %v872 = vpack.c.b16 %v861, %v860
    %v873 = vpack.c.b16 %v863, %v862
    %v874 = vpack.c.b16 %v865, %v864
    %v875 = vpack.c.b16 %v867, %v866
    %884 = vmatprep.subr.bf16.mxu0 0
    %885 = vmatpush1.bf16.msra.mxu0 %v868
    %886 = vmatprep.subr.bf16.mxu0 0
    %887 = vmatpush1.bf16.msra.mxu0 %v869
    %888 = vmatprep.subr.bf16.mxu0 0
    %889 = vmatpush1.bf16.msra.mxu0 %v870
    %890 = vmatprep.subr.bf16.mxu0 0
    %891 = vmatpush1.bf16.msra.mxu0 %v871
    %892 = vmatprep.subr.bf16.mxu0 0
    %893 = vmatpush1.bf16.msra.mxu0 %v872
    %894 = vmatprep.subr.bf16.mxu0 0
    %895 = vmatpush1.bf16.msra.mxu0 %v873
    %896 = vmatprep.subr.bf16.mxu0 0
    %897 = vmatpush1.bf16.msra.mxu0 %v874
    %898 = vmatprep.subr.bf16.mxu0 0
    %899 = vmatpush1.bf16.msra.mxu0 %v875
    %900 = vmatprep.subr.bf16.mxu0 0
    %901 = vmatpush1.bf16.msra.mxu0 0
    %902 = vmatprep.subr.bf16.mxu0 0
    %903 = vmatpush1.bf16.msra.mxu0 0
    %904 = vmatprep.subr.bf16.mxu0 0
    %905 = vmatpush1.bf16.msra.mxu0 0
    %906 = vmatprep.subr.bf16.mxu0 0
    %907 = vmatpush1.bf16.msra.mxu0 0
    %908 = vmatprep.subr.bf16.mxu0 0
    %909 = vmatpush1.bf16.msra.mxu0 0
    %910 = vmatprep.subr.bf16.mxu0 0
    %911 = vmatpush1.bf16.msra.mxu0 0
    %912 = vmatprep.subr.bf16.mxu0 0
    %913 = vmatpush1.bf16.msra.mxu0 0
    %914 = vmatprep.subr.bf16.mxu0 0
    %915 = vmatpush1.bf16.msra.mxu0 0
    %916 = vmatprep.mubr.bf16.mxu0 0
    %917 = vmatmul.mubr.bf16.gmra.mrb[0].mxu0 %v812
    %v918 = vpop.f32.mrb[0].mxu0
    %v919 = vadd.f32 %v834, %v918
    %v920 = vpop.f32.mrb[0].mxu0
    %v921 = vpop.f32.mrb[0].mxu0
    %v922 = vpop.f32.mrb[0].mxu0
    %923 = vdwg.mxu0
    %924 = vst [vmem:[%s12] sm:$0xff] %v919
    // Predicated region
    $region82: #{critic_forward.1} parent=1 // pred_check
      _
    $region83: #{critic_forward.1} parent=1 // pred_check_branch
      %926 = sbr.rel (0) target = $region85
    $region84: #{critic_forward.1} parent=1 // pred_region
      _
    $region85: #{critic_forward.1} parent=1 // pred_fallthru
      _
    // Predicated region
    $region86: #{critic_forward.1} parent=1 // pred_check
      _
    $region87: #{critic_forward.1} parent=1 // pred_check_branch
      %928 = sbr.rel (0) target = $region89
    $region88: #{critic_forward.1} parent=1 // pred_region
      _
    $region89: #{critic_forward.1} parent=1 // pred_fallthru
      _
    %929 = vsyncpa [#allocation3], 1
    %930 = vsyncpa [#allocation5], 1
    %931 = vsyncpa [#allocation8], 1
    %932 = vsyncpa [#allocation11], 1
    %933 = vsyncpa [#allocation14], 1

</llo_original>
